<compile_context>
chip_gen: v7x
topology: tpu7x:2x2x1
jax: 0.10.0
libtpu: 0.0.40
codegen_flags: <defaults>
</compile_context>

<pallas_src>
import jax
import jax.numpy as jnp
from jax.experimental import pallas as pl
from jax.experimental.pallas import tpu as pltpu


def _cdiv(a, b):
    return (a + b - 1) // b


def _round_up(v, m):
    return _cdiv(v, m) * m


def _linear_kernel(x_ref, w_ref, b_ref, mean_ref):
    # (tile_b, K) @ (K, N) on the MXU with f32 accumulation, then add the bias
    # row and store in the output dtype. No transposes / padding on the hot path.
    acc = jnp.dot(x_ref[...], w_ref[...], preferred_element_type=jnp.float32)
    mean_ref[...] = (acc + b_ref[...]).astype(mean_ref.dtype)


def prepare_diag_gaussian_params(weight, bias, logstd_bias, compute_dtype=None):
    """Call-once parameter prep (hoisted out of the per-step path).

    weight:      (N, K) nn.Linear weight
    bias:        (N,)   nn.Linear bias
    logstd_bias: (N,)   AddBias parameter (torch.zeros(out_dim) at init)

    Returns:
      w_kn    : (K, N) pre-transposed weight in compute dtype
      b_row   : (1, N) bias row (f32; added to the f32 accumulator)
      std_row : (1, N) exp(logstd_bias) — batch-independent, so computed once
                here instead of per kernel step.
    """
    if compute_dtype is None:
        compute_dtype = weight.dtype
    w_kn = weight.T.astype(compute_dtype)                       # (K, N)
    b_row = bias.astype(jnp.float32).reshape(1, -1)              # (1, N)
    std_row = jnp.exp(logstd_bias.astype(jnp.float32)).reshape(1, -1)
    return w_kn, b_row, std_row


def _pick_batch_tiling(B, K, N, itemsize, max_tile=8192, min_split=512):
    """Choose (tile_b, n_steps, Bp) with at most ~8 rows of padding per step."""
    B8 = _round_up(B, 8)
    # VMEM budget: stay under the smallest default scoped-VMEM limit across
    # generations (v5e at 16 MiB) with headroom. Per-row footprint is the
    # double-buffered x tile plus the double-buffered mean tile; the resident
    # W / bias blocks are negligible here.
    budget = 14 * 1024 * 1024
    per_row = 2 * itemsize * (K + N)
    cap = max(8, min(max_tile, budget // max(per_row, 1)))
    n_steps = max(1, _cdiv(B8, cap))
    # Ensure >= 2 steps for big batches so the "parallel" batch axis can shard
    # across v7x's two TensorCores; harmless on single-TC v5e/v6e.
    if n_steps == 1 and B8 >= 2 * min_split:
        n_steps = 2
    tile_b = _round_up(_cdiv(B8, n_steps), 8)
    Bp = n_steps * tile_b
    return tile_b, n_steps, Bp


def diag_gaussian_forward(x, w_kn, b_row, std_row, out_dtype=None):
    """DiagGaussian forward (use prepare_diag_gaussian_params for the params).

    Returns:
      mean    : (B, N) = x @ W.T + b
      std_row : (1, N) = exp(logstd_bias); broadcasts against mean exactly as
                         FixedNormal(mean, logstd.exp()) would.
    """
    B, K = x.shape
    K2, N = w_kn.shape
    assert K == K2
    if out_dtype is None:
        out_dtype = x.dtype

    itemsize = max(jnp.dtype(x.dtype).itemsize, jnp.dtype(out_dtype).itemsize)
    tile_b, n_steps, Bp = _pick_batch_tiling(B, K, N, itemsize)

    # Pad only when needed (at most ~8 rows per grid step); common aligned
    # batches go straight through with zero extra HBM passes.
    x_in = x if Bp == B else jnp.pad(x, ((0, Bp - B), (0, 0)))

    cost = pl.CostEstimate(
        flops=2 * Bp * K * N,
        transcendentals=0,
        bytes_accessed=(jnp.dtype(x.dtype).itemsize * Bp * K
                        + jnp.dtype(w_kn.dtype).itemsize * K * N
                        + 4 * N
                        + jnp.dtype(out_dtype).itemsize * Bp * N),
    )

    mean_p = pl.pallas_call(
        _linear_kernel,
        out_shape=jax.ShapeDtypeStruct((Bp, N), out_dtype),
        grid=(n_steps,),
        in_specs=[
            pl.BlockSpec((tile_b, K), lambda i: (i, 0)),   # x: batch-tiled stream
            pl.BlockSpec((K, N), lambda i: (0, 0)),        # W^T: VMEM-resident
            pl.BlockSpec((1, N), lambda i: (0, 0)),        # bias row: resident
        ],
        out_specs=pl.BlockSpec((tile_b, N), lambda i: (i, 0)),  # mean tile
        compiler_params=pltpu.CompilerParams(
            dimension_semantics=("parallel",),
        ),
        cost_estimate=cost,
    )(x_in, w_kn, b_row)

    mean = mean_p if Bp == B else mean_p[:B]
    return mean, std_row


if __name__ == "__main__":
    # Small shapes consistent with DiagGaussian(inp_dim, out_dim).
    batch, inp_dim, out_dim = 8, 32, 16

    key = jax.random.PRNGKey(0)
    kx, kw, kb = jax.random.split(key, 3)

    x = jax.random.normal(kx, (batch, inp_dim), dtype=jnp.float32)

    # Mimic nn.Linear default uniform init.
    limit = float(inp_dim) ** -0.5
    weight = jax.random.uniform(kw, (out_dim, inp_dim), jnp.float32, -limit, limit)
    bias = jax.random.uniform(kb, (out_dim,), jnp.float32, -limit, limit)
    # AddBias(torch.zeros(out_dim)): logstd bias initialized to zeros.
    logstd_bias = jnp.zeros((out_dim,), dtype=jnp.float32)

    # Parameter prep is call-once (weights are constant across PPO forwards).
    w_kn, b_row, std_row = prepare_diag_gaussian_params(weight, bias, logstd_bias)

    mean, std = diag_gaussian_forward(x, w_kn, b_row, std_row)
    jax.block_until_ready((mean, std))

    # Reference check in plain JAX.
    mean_ref = x @ weight.T + bias
    std_ref = jnp.exp(logstd_bias)[None, :]
    assert mean.shape == (batch, out_dim)
    assert std.shape == (1, out_dim)
    assert jnp.allclose(mean, mean_ref, atol=1e-5, rtol=1e-5)
    assert jnp.allclose(std, std_ref, atol=1e-6, rtol=1e-6)
    # std broadcasts against mean exactly like FixedNormal(mean, logstd.exp()).
    assert jnp.broadcast_to(std, mean.shape).shape == mean.shape

    print("KERNEL_OK")
</pallas_src>

<mosaic_0001>
module attributes {stable_mosaic.version = 11 : i64} {
  func.func @_linear_kernel(%arg0: i32, %arg1: memref<8x32xf32, #tpu.memory_space<vmem>>, %arg2: memref<32x16xf32, #tpu.memory_space<vmem>>, %arg3: memref<1x16xf32, #tpu.memory_space<vmem>>, %arg4: memref<8x16xf32, #tpu.memory_space<vmem>>) attributes {dimension_semantics = [#tpu.dimension_semantics<parallel>], iteration_bounds = array<i64: 1>, scalar_prefetch = 0 : i64, scratch_operands = 0 : i64, tpu.core_type = #tpu.core_type<tc>, window_params = [{transform_indices = @transform_0, window_bounds = array<i64: 8, 32>}, {pipeline_mode = #tpu.pipeline_mode<synchronous>, transform_indices = @transform_1, window_bounds = array<i64: 32, 16>}, {pipeline_mode = #tpu.pipeline_mode<synchronous>, transform_indices = @transform_2, window_bounds = array<i64: 1, 16>}, {transform_indices = @transform_3, window_bounds = array<i64: 8, 16>}]} {
    %c0 = arith.constant 0 : index
    %c0_0 = arith.constant 0 : index
    %0 = vector.load %arg1[%c0, %c0_0] : memref<8x32xf32, #tpu.memory_space<vmem>>, vector<8x32xf32>
    %c0_1 = arith.constant 0 : index
    %c0_2 = arith.constant 0 : index
    %1 = vector.load %arg2[%c0_1, %c0_2] : memref<32x16xf32, #tpu.memory_space<vmem>>, vector<32x16xf32>
    %cst = arith.constant dense<0.000000e+00> : vector<8x16xf32>
    %2 = tpu.matmul %0, %1, %cst {dimension_numbers = #tpu.dot_dimension_numbers<[1], [0], [0], [1], [0, 0, 1, 1], [], []>} : vector<8x32xf32>, vector<32x16xf32>, vector<8x16xf32> -> vector<8x16xf32>
    %c0_3 = arith.constant 0 : index
    %c0_4 = arith.constant 0 : index
    %3 = vector.load %arg3[%c0_3, %c0_4] : memref<1x16xf32, #tpu.memory_space<vmem>>, vector<1x16xf32>
    %4 = vector.broadcast %3 : vector<1x16xf32> to vector<8x16xf32>
    %5 = arith.addf %2, %4 : vector<8x16xf32>
    %c0_5 = arith.constant 0 : index
    %c0_6 = arith.constant 0 : index
    %6 = vector.load %arg4[%c0_5, %c0_6] : memref<8x16xf32, #tpu.memory_space<vmem>>, vector<8x16xf32>
    tpu.vector_store %arg4[%c0_5, %c0_6], %5 {strides = array<i32>} : memref<8x16xf32, #tpu.memory_space<vmem>>, vector<8x16xf32>,
    return
  }
  func.func @transform_0(%arg0: i32) -> (i32, i32) {
    %c0_i32 = arith.constant 0 : i32
    %c0_i32_0 = arith.constant 0 : i32
    return %arg0, %c0_i32 : i32, i32
  }
  func.func @transform_1(%arg0: i32) -> (i32, i32) {
    %c0_i32 = arith.constant 0 : i32
    %c0_i32_0 = arith.constant 0 : i32
    %c0_i32_1 = arith.constant 0 : i32
    return %c0_i32, %c0_i32_0 : i32, i32
  }
  func.func @transform_2(%arg0: i32) -> (i32, i32) {
    %c0_i32 = arith.constant 0 : i32
    %c0_i32_0 = arith.constant 0 : i32
    %c0_i32_1 = arith.constant 0 : i32
    return %c0_i32, %c0_i32_0 : i32, i32
  }
  func.func @transform_3(%arg0: i32) -> (i32, i32) {
    %c0_i32 = arith.constant 0 : i32
    %c0_i32_0 = arith.constant 0 : i32
    return %arg0, %c0_i32 : i32, i32
  }
}

</mosaic_0001>

<llo_original>
// kernel: tpu_custom_call.1
$region0: #{tpu_custom_call.1}
  #allocation0 [shape = 'u32[]', space=smem, size = 0x4, offset = 0x4, fixed_abs, tag = 'smem constant byte address 0x4 - core index']
  #allocation1 [shape = 'u32[144,128]{1,0:T(1,128)}', space=vmem, size = 0x12000, scoped, tag = 'internal scratch']
  %s0 = inlined_call_operand.vmem [shape: f32[8,32], index: 0, kind: input, shape index: {}]
  %s1 = inlined_call_operand.vmem [shape: f32[32,16], index: 1, kind: input, shape index: {}]
  %s2 = inlined_call_operand.vmem [shape: f32[1,16], index: 2, kind: input, shape index: {}]
  %s3 = inlined_call_operand.hbm [shape: f32[8,16], index: 3, kind: output, shape index: {}]
  %s4 = sld [smem:[#allocation0]]
  $region22: #{tpu_custom_call.1} parent=0
    _
  %s6 = ssub.s32 1, %s4
  %s7 = scalar_select 0, %s6, %s4
  $region1: #{tpu_custom_call.1} parent=0
    #allocation2 [shape = 'u8[4096]{0}', space=vmem, size = 0x1000, scoped, tag = 'output window, operand 0, single buffered']
    #allocation3 [shape = 's32[1]{0}', space=sflag, size = 0x4, scoped, tag = 'scoped memory for tpu_custom_call.1']
    %8 = vsyncpa [#allocation3], 0
    // Predicated region
    $region2: #{tpu_custom_call.1} parent=1 // pred_check
      _
    $region3: #{tpu_custom_call.1} parent=1 // pred_check_branch
      %10 = sbr.rel (0) target = $region5
    $region4: #{tpu_custom_call.1} parent=1 // pred_region
      _
    $region5: #{tpu_custom_call.1} parent=1 // pred_fallthru
      _
    // Predicated region
    $region6: #{tpu_custom_call.1} parent=1 // pred_check
      _
    $region7: #{tpu_custom_call.1} parent=1 // pred_check_branch
      %12 = sbr.rel (0) target = $region9
    $region8: #{tpu_custom_call.1} parent=1 // pred_region
      _
    $region9: #{tpu_custom_call.1} parent=1 // pred_fallthru
      _
    // Predicated region
    $region10: #{tpu_custom_call.1} parent=1 // pred_check
      _
    $region11: #{tpu_custom_call.1} parent=1 // pred_check_branch
      %14 = sbr.rel (0) target = $region13
    $region12: #{tpu_custom_call.1} parent=1 // pred_region
      _
    $region13: #{tpu_custom_call.1} parent=1 // pred_fallthru
      _
    %v15 = vld [vmem:[%s0] sm:$0xff]
    %v16 = vld [vmem:[%s1] sm:$0xff]
    %v17 = vld [vmem:[%s1 + $0x8] sm:$0xff]
    %v18 = vld [vmem:[%s1 + $0x10] sm:$0xff]
    %v19 = vld [vmem:[%s1 + $0x18] sm:$0xff]
    %v20 = vld [vmem:[%s2] sm:$0x1]
    %v22 = vlaneseq
    %v23 = vshrl.u32 %v22, 7
    %v24 = vsub.s32 0, %v23
    %v25 = vrot.slane %v20, %v24
    %vm27 = vcmask 261120
    %v29 = vsel %vm27, %v15, 0
    %31 = vmatprep.subr.mxu0 0.0
    %32 = vmatpush1.msra.mxu0 %v16
    %33 = vmatprep.subr.mxu0 0.0
    %34 = vmatpush1.msra.mxu0 %v17
    %35 = vmatprep.subr.mxu0 0.0
    %36 = vmatpush1.msra.mxu0 %v18
    %37 = vmatprep.subr.mxu0 0.0
    %38 = vmatpush1.msra.mxu0 %v19
    %39 = vmatprep.subr.mxu0 0.0
    %40 = vmatpush1.msra.mxu0 0.0
    %41 = vmatprep.subr.mxu0 0.0
    %42 = vmatpush1.msra.mxu0 0.0
    %43 = vmatprep.subr.mxu0 0.0
    %44 = vmatpush1.msra.mxu0 0.0
    %45 = vmatprep.subr.mxu0 0.0
    %46 = vmatpush1.msra.mxu0 0.0
    %47 = vmatprep.subr.mxu0 0.0
    %48 = vmatpush1.msra.mxu0 0.0
    %49 = vmatprep.subr.mxu0 0.0
    %50 = vmatpush1.msra.mxu0 0.0
    %51 = vmatprep.subr.mxu0 0.0
    %52 = vmatpush1.msra.mxu0 0.0
    %53 = vmatprep.subr.mxu0 0.0
    %54 = vmatpush1.msra.mxu0 0.0
    %55 = vmatprep.subr.mxu0 0.0
    %56 = vmatpush1.msra.mxu0 0.0
    %57 = vmatprep.subr.mxu0 0.0
    %58 = vmatpush1.msra.mxu0 0.0
    %59 = vmatprep.subr.mxu0 0.0
    %60 = vmatpush1.msra.mxu0 0.0
    %61 = vmatprep.subr.mxu0 0.0
    %62 = vmatpush1.msra.mxu0 0.0
    %63 = vmatprep.subr.mxu0 0.0
    %64 = vmatpush1.msra.mxu0 0.0
    %65 = vmatprep.subr.mxu0 0.0
    %66 = vmatpush1.msra.mxu0 0.0
    %67 = vmatprep.subr.mxu0 0.0
    %68 = vmatpush1.msra.mxu0 0.0
    %69 = vmatprep.subr.mxu0 0.0
    %70 = vmatpush1.msra.mxu0 0.0
    %71 = vmatprep.subr.mxu0 0.0
    %72 = vmatpush1.msra.mxu0 0.0
    %73 = vmatprep.subr.mxu0 0.0
    %74 = vmatpush1.msra.mxu0 0.0
    %75 = vmatprep.subr.mxu0 0.0
    %76 = vmatpush1.msra.mxu0 0.0
    %77 = vmatprep.subr.mxu0 0.0
    %78 = vmatpush1.msra.mxu0 0.0
    %79 = vmatprep.subr.mxu0 0.0
    %80 = vmatpush1.msra.mxu0 0.0
    %81 = vmatprep.subr.mxu0 0.0
    %82 = vmatpush1.msra.mxu0 0.0
    %83 = vmatprep.subr.mxu0 0.0
    %84 = vmatpush1.msra.mxu0 0.0
    %85 = vmatprep.subr.mxu0 0.0
    %86 = vmatpush1.msra.mxu0 0.0
    %87 = vmatprep.subr.mxu0 0.0
    %88 = vmatpush1.msra.mxu0 0.0
    %89 = vmatprep.subr.mxu0 0.0
    %90 = vmatpush1.msra.mxu0 0.0
    %91 = vmatprep.subr.mxu0 0.0
    %92 = vmatpush1.msra.mxu0 0.0
    %93 = vmatprep.subr.mxu0 0.0
    %94 = vmatpush1.msra.mxu0 0.0
    %95 = vmatprep.mubr.f32.mxu0 0.0
    %96 = vmatmul.mubr.f32.gmra.mrb[0].mxu0 %v29
    %v97 = vpop.f32.mrb[0].mxu0
    %v98 = vadd.f32 %v25, %v97
    %v99 = vpop.f32.mrb[0].mxu0
    %100 = vdwg.mxu0
    %vm101 = vcmask 130048
    %102 = vst.msk [vmem:[#allocation2] sm:$0xff] %vm101, %v98
    // Predicated region
    $region14: #{tpu_custom_call.1} parent=1 // pred_check
      _
    $region15: #{tpu_custom_call.1} parent=1 // pred_check_branch
      %104 = sbr.rel (0) target = $region17
    $region16: #{tpu_custom_call.1} parent=1 // pred_region
      %s106 = ssub.s32 128, 128
      %107 = vsyncadd [#allocation3], %s106
      %s109 = sshll.u32 [#allocation2], 4
      %s110 = int_to_ptr.vmem [resolvable:$true] %s109
      %112 = dma.vmem_to_hbm [thread:$0]  %s110, 128, %s3, [#allocation3]
    $region17: #{tpu_custom_call.1} parent=1 // pred_fallthru
      _
    // Predicated region
    $region18: #{tpu_custom_call.1} parent=1 // pred_check
      _
    $region19: #{tpu_custom_call.1} parent=1 // pred_check_branch
      %114 = sbr.rel (0) target = $region21
    $region20: #{tpu_custom_call.1} parent=1 // pred_region
      %115 = dma.done [#allocation3], 128
    $region21: #{tpu_custom_call.1} parent=1 // pred_fallthru
      _
    %116 = vsyncpa [#allocation3], 1

</llo_original>
